<compile_context>
chip_gen: v7x
topology: tpu7x:2x2x1
jax: 0.10.0
libtpu: 0.0.40
codegen_flags: <defaults>
</compile_context>

<pallas_src>
import math
from functools import partial

import jax
import jax.numpy as jnp
from jax.experimental import pallas as pl
from jax.experimental.pallas import tpu as pltpu


_INV_SQRT2 = 1.0 / math.sqrt(2.0)
_SQRT_2_OVER_PI = math.sqrt(2.0 / math.pi)


def _round_up(x, m):
    return (x + m - 1) // m * m


def _gelu_f32(h, approx):
    """GELU in f32. approx=True -> tanh form (EUP); False -> exact erf (nn.GELU())."""
    if approx:
        c = jnp.float32(_SQRT_2_OVER_PI)
        return 0.5 * h * (1.0 + jnp.tanh(c * (h + jnp.float32(0.044715) * h * h * h)))
    return 0.5 * h * (1.0 + jax.lax.erf(h * jnp.float32(_INV_SQRT2)))


def _pad_cast(a, shape, dtype):
    """Zero-pad/cast only if needed; returns `a` untouched in the aligned case."""
    if a.shape == tuple(shape) and a.dtype == jnp.dtype(dtype):
        return a
    out = jnp.zeros(shape, dtype)
    return out.at[tuple(slice(0, s) for s in a.shape)].set(a.astype(dtype))


def mlp_kernel(x_ref, w1_ref, b1_ref, w2_ref, b2_ref, o_ref, acc_ref,
               *, gelu_approx):
    """One (tm, C_pad) row tile x one hidden tile of width th.

    x_ref : (tm, C_pad)   caller dtype (cast to compute dtype in-kernel)
    w1_ref: (C_pad, th)   compute dtype
    b1_ref: (1, th)       f32
    w2_ref: (th, C_pad)   compute dtype
    b2_ref: (1, C_pad)    f32
    o_ref : (tm, C_pad)   output dtype
    acc_ref: (tm, C_pad)  f32 accumulator, resident across the hidden grid axis
    """
    h_idx = pl.program_id(1)

    @pl.when(h_idx == 0)
    def _():
        # Seed the accumulator with the fc2 bias -> no epilogue full-tile add.
        acc_ref[...] = jnp.broadcast_to(b2_ref[...], acc_ref.shape)

    # fc1 slice: (tm, C) @ (C, th) -> (tm, th), f32 accumulation on the MXU.
    x = x_ref[...].astype(w1_ref.dtype)
    h = jnp.dot(x, w1_ref[...], preferred_element_type=jnp.float32)
    h = h + b1_ref[...]

    # GELU in f32 (tanh form goes to the EUP; erf form for exact nn.GELU parity).
    h = _gelu_f32(h, gelu_approx)

    # Partial fc2 contribution of this hidden tile: (tm, th) @ (th, C) -> (tm, C).
    acc_ref[...] += jnp.dot(h.astype(w2_ref.dtype), w2_ref[...],
                            preferred_element_type=jnp.float32)

    @pl.when(h_idx == pl.num_programs(1) - 1)
    def _():
        # Dropout with p=0.0 -> identity.
        # TODO(synk): wire pltpu.prng_seed / prng_random_bits for p>0 training dropout.
        o_ref[...] = acc_ref[...].astype(o_ref.dtype)


def mlp_forward(x, w1, b1, w2, b2, *, tm=512, th=512,
                compute_dtype=jnp.bfloat16, out_dtype=None, gelu="tanh"):
    """Fused MLP forward.

    x : (..., C)  (any float dtype; output dtype = out_dtype or x.dtype)
    w1: (C, H) = fc1.weight.T     b1: (H,)
    w2: (H, C) = fc2.weight.T     b2: (C,)
    tm: row tile  (auto-shrunk, 16-aligned; larger tm => higher arithmetic intensity)
    th: hidden-dim tile (128-multiple), streamed with a resident f32 accumulator
    gelu: "tanh" (EUP, ~1e-3 off exact) or "exact" (erf; matches nn.GELU()).

    Callers on a hot path should pre-cast/pre-pad the (static) weights once so the
    aligned fast-path below passes them through with zero copies.
    """
    *lead, C = x.shape
    M = int(math.prod(lead)) if lead else 1
    H = w1.shape[1]
    out_dtype = x.dtype if out_dtype is None else out_dtype

    x_isz = jnp.dtype(x.dtype).itemsize
    w_isz = jnp.dtype(compute_dtype).itemsize
    o_isz = jnp.dtype(out_dtype).itemsize

    # Lane/sublane-friendly padded sizes.
    C_pad = _round_up(C, 128)
    th = min(_round_up(th, 128), _round_up(H, 128))
    tm = min(_round_up(tm, 16), _round_up(M, 16))

    # Generation-aware VMEM budget (~80% of physical: ~100 MiB v5e/v6e, ~51 MiB v7x).
    try:
        vmem_cap = int(pltpu.get_tpu_info().vmem_capacity_bytes)
    except Exception:
        vmem_cap = 64 * 2**20          # conservative fallback (safe on every gen)
    budget = int(vmem_cap * 0.8)

    def vmem_est(tm_, th_):
        return (2 * tm_ * C_pad * x_isz                       # x tiles (dbl-buffered)
                + 2 * (C_pad * th_ + th_ * C_pad) * w_isz     # W1 + W2 tiles
                + 2 * (th_ + C_pad) * 4                       # biases (f32)
                + 2 * tm_ * C_pad * o_isz                     # out tiles
                + tm_ * C_pad * 4)                            # resident f32 accumulator

    # Shrink hidden tile first (keeps intensity ~ tm), then the row tile.
    while vmem_est(tm, th) > budget and th > 128:
        th = max(128, _round_up(th // 2, 128))
    while vmem_est(tm, th) > budget and tm > 128:
        tm = max(128, _round_up(tm // 2, 16))
    # TODO(synk): for very wide C on v7x, additionally tile the fc1 contraction
    # over C with an inner pltpu.emit_pipeline instead of shrinking tm.
    # TODO(synk): on v7x, split the row axis so M_pad//tm >= 2 (both TensorCores
    # busy) once a reliable core-count query is available.

    H_pad = _round_up(H, th)
    M_pad = _round_up(M, tm)
    grid = (M_pad // tm, H_pad // th)        # reduction (hidden) axis last

    # Zero-padded / casted operands (no-op copies when already aligned).
    x2 = _pad_cast(x.reshape(M, C), (M_pad, C_pad), x.dtype)
    w1p = _pad_cast(w1, (C_pad, H_pad), compute_dtype)
    w2p = _pad_cast(w2, (H_pad, C_pad), compute_dtype)
    b1p = _pad_cast(b1.reshape(1, H), (1, H_pad), jnp.float32)
    b2p = _pad_cast(b2.reshape(1, C), (1, C_pad), jnp.float32)

    est = vmem_est(tm, th)
    vmem_limit = int(min(budget, max(int(est * 1.5), 32 * 2**20)))

    n_row_tiles = M_pad // tm
    cost = pl.CostEstimate(
        flops=2 * M_pad * C_pad * H_pad * 2,                     # fc1 + fc2
        transcendentals=M_pad * H_pad,                           # tanh / erf
        bytes_accessed=(M_pad * C_pad * x_isz                    # x read once
                        + n_row_tiles * 2 * C_pad * H_pad * w_isz  # W1+W2 re-streamed
                        + M_pad * C_pad * o_isz))                # output writeback

    out = pl.pallas_call(
        partial(mlp_kernel, gelu_approx=(gelu == "tanh")),
        out_shape=jax.ShapeDtypeStruct((M_pad, C_pad), out_dtype),
        grid_spec=pltpu.PrefetchScalarGridSpec(
            num_scalar_prefetch=0,
            grid=grid,
            in_specs=[
                pl.BlockSpec((tm, C_pad), lambda i, h: (i, 0)),   # x row tile
                pl.BlockSpec((C_pad, th), lambda i, h: (0, h)),   # W1 hidden tile
                pl.BlockSpec((1, th),     lambda i, h: (0, h)),   # b1 hidden tile
                pl.BlockSpec((th, C_pad), lambda i, h: (h, 0)),   # W2 hidden tile
                pl.BlockSpec((1, C_pad),  lambda i, h: (0, 0)),   # b2 (full)
            ],
            out_specs=pl.BlockSpec((tm, C_pad), lambda i, h: (i, 0)),
            scratch_shapes=[pltpu.VMEM((tm, C_pad), jnp.float32)],
        ),
        compiler_params=pltpu.CompilerParams(
            dimension_semantics=("parallel", "arbitrary"),
            vmem_limit_bytes=vmem_limit),
        cost_estimate=cost,
    )(x2, w1p, b1p, w2p, b2p)

    return out[:M, :C].reshape(*lead, C)


def reference_mlp(x, w1, b1, w2, b2, *, compute_dtype=jnp.bfloat16, gelu="tanh"):
    """Pure-JAX reference mirroring the kernel's mixed precision and GELU choice."""
    xf = x.astype(compute_dtype).astype(jnp.float32)
    h = xf @ w1.astype(compute_dtype).astype(jnp.float32) + b1.astype(jnp.float32)
    h = _gelu_f32(h, gelu == "tanh")
    h = h.astype(compute_dtype).astype(jnp.float32)
    y = h @ w2.astype(compute_dtype).astype(jnp.float32) + b2.astype(jnp.float32)
    return y


if __name__ == "__main__":
    # Small config consistent with the module: n_embd=64, bias=True, dropout=0.0
    B, T, C = 2, 8, 64
    H = 4 * C

    key = jax.random.PRNGKey(0)
    kx, k_w1, k_b1, k_w2, k_b2 = jax.random.split(key, 5)

    x = jax.random.normal(kx, (B, T, C), dtype=jnp.float32)

    # fc1: PyTorch default init ~ U(-1/sqrt(C), 1/sqrt(C)); stored as (C, H) = W1.T
    bound1 = 1.0 / math.sqrt(C)
    w1 = jax.random.uniform(k_w1, (C, H), minval=-bound1, maxval=bound1,
                            dtype=jnp.float32)
    b1 = jax.random.uniform(k_b1, (H,), minval=-bound1, maxval=bound1,
                            dtype=jnp.float32)

    # fc2: xavier_uniform_ on weight (C_out=C, C_in=H); stored as (H, C) = W2.T
    xav = math.sqrt(6.0 / (C + H))
    w2 = jax.random.uniform(k_w2, (H, C), minval=-xav, maxval=xav,
                            dtype=jnp.float32)
    bound2 = 1.0 / math.sqrt(H)
    b2 = jax.random.uniform(k_b2, (C,), minval=-bound2, maxval=bound2,
                            dtype=jnp.float32)

    # th=128 so the small config still exercises the hidden-tile accumulation
    # grid axis (H_pad=256 -> 2 reduction steps).
    y = mlp_forward(x, w1, b1, w2, b2, tm=512, th=128,
                    compute_dtype=jnp.bfloat16, gelu="tanh")
    y = jax.block_until_ready(y)

    y_ref = reference_mlp(x.reshape(-1, C), w1, b1, w2, b2,
                          compute_dtype=jnp.bfloat16, gelu="tanh").reshape(B, T, C)

    assert y.shape == x.shape and y.dtype == x.dtype
    assert jnp.allclose(y.astype(jnp.float32), y_ref, atol=2e-2, rtol=2e-2), \
        "mismatch vs reference"

    print("KERNEL_OK")
</pallas_src>

<mosaic_0001>
module attributes {stable_mosaic.version = 11 : i64} {
  func.func @mlp_kernel(%arg0: i32, %arg1: i32, %arg2: memref<16x128xf32, #tpu.memory_space<vmem>>, %arg3: memref<128x128xbf16, #tpu.memory_space<vmem>>, %arg4: memref<1x128xf32, #tpu.memory_space<vmem>>, %arg5: memref<128x128xbf16, #tpu.memory_space<vmem>>, %arg6: memref<1x128xf32, #tpu.memory_space<vmem>>, %arg7: memref<16x128xf32, #tpu.memory_space<vmem>>, %arg8: memref<16x128xf32, #tpu.memory_space<vmem>>) attributes {dimension_semantics = [#tpu.dimension_semantics<parallel>, #tpu.dimension_semantics<arbitrary>], iteration_bounds = array<i64: 1, 2>, scalar_prefetch = 0 : i64, scratch_operands = 1 : i64, tpu.core_type = #tpu.core_type<tc>, window_params = [{transform_indices = @transform_0, window_bounds = array<i64: 16, 128>}, {transform_indices = @transform_1, window_bounds = array<i64: 128, 128>}, {transform_indices = @transform_2, window_bounds = array<i64: 1, 128>}, {transform_indices = @transform_3, window_bounds = array<i64: 128, 128>}, {pipeline_mode = #tpu.pipeline_mode<synchronous>, transform_indices = @transform_4, window_bounds = array<i64: 1, 128>}, {transform_indices = @transform_5, window_bounds = array<i64: 16, 128>}]} {
    %c0_i32 = arith.constant 0 : i32
    %0 = arith.cmpi eq, %arg1, %c0_i32 : i32
    %1 = arith.extui %0 : i1 to i32
    %c0_i32_0 = arith.constant 0 : i32
    %2 = arith.cmpi ne, %1, %c0_i32_0 : i32
    scf.if %2 {
      %c0_18 = arith.constant 0 : index
      %c0_19 = arith.constant 0 : index
      %32 = vector.load %arg6[%c0_18, %c0_19] : memref<1x128xf32, #tpu.memory_space<vmem>>, vector<1x128xf32>
      %33 = vector.shape_cast %32 : vector<1x128xf32> to vector<1x128xf32>
      %34 = vector.broadcast %33 : vector<1x128xf32> to vector<16x128xf32>
      %c0_20 = arith.constant 0 : index
      %c0_21 = arith.constant 0 : index
      %35 = vector.load %arg8[%c0_20, %c0_21] : memref<16x128xf32, #tpu.memory_space<vmem>>, vector<16x128xf32>
      tpu.vector_store %arg8[%c0_20, %c0_21], %34 {strides = array<i32>} : memref<16x128xf32, #tpu.memory_space<vmem>>, vector<16x128xf32>,
    } else {
    }
    %c0 = arith.constant 0 : index
    %c0_1 = arith.constant 0 : index
    %3 = vector.load %arg2[%c0, %c0_1] : memref<16x128xf32, #tpu.memory_space<vmem>>, vector<16x128xf32>
    %4 = arith.truncf %3 : vector<16x128xf32> to vector<16x128xbf16>
    %c0_2 = arith.constant 0 : index
    %c0_3 = arith.constant 0 : index
    %5 = vector.load %arg3[%c0_2, %c0_3] : memref<128x128xbf16, #tpu.memory_space<vmem>>, vector<128x128xbf16>
    %cst = arith.constant dense<0.000000e+00> : vector<16x128xf32>
    %6 = tpu.matmul %4, %5, %cst {dimension_numbers = #tpu.dot_dimension_numbers<[1], [0], [0], [1], [0, 0, 1, 1], [], []>} : vector<16x128xbf16>, vector<128x128xbf16>, vector<16x128xf32> -> vector<16x128xf32>
    %c0_4 = arith.constant 0 : index
    %c0_5 = arith.constant 0 : index
    %7 = vector.load %arg4[%c0_4, %c0_5] : memref<1x128xf32, #tpu.memory_space<vmem>>, vector<1x128xf32>
    %8 = vector.broadcast %7 : vector<1x128xf32> to vector<16x128xf32>
    %9 = arith.addf %6, %8 : vector<16x128xf32>
    %cst_6 = arith.constant 5.000000e-01 : f32
    %10 = vector.broadcast %cst_6 : f32 to vector<16x128xf32>
    %11 = arith.mulf %10, %9 : vector<16x128xf32>
    %cst_7 = arith.constant 4.471500e-02 : f32
    %12 = vector.broadcast %cst_7 : f32 to vector<16x128xf32>
    %13 = arith.mulf %12, %9 : vector<16x128xf32>
    %14 = arith.mulf %13, %9 : vector<16x128xf32>
    %15 = arith.mulf %14, %9 : vector<16x128xf32>
    %16 = arith.addf %9, %15 : vector<16x128xf32>
    %cst_8 = arith.constant 0.797884583 : f32
    %17 = vector.broadcast %cst_8 : f32 to vector<16x128xf32>
    %18 = arith.mulf %17, %16 : vector<16x128xf32>
    %19 = math.tanh %18 : vector<16x128xf32>
    %cst_9 = arith.constant 1.000000e+00 : f32
    %20 = vector.broadcast %cst_9 : f32 to vector<16x128xf32>
    %21 = arith.addf %20, %19 : vector<16x128xf32>
    %22 = arith.mulf %11, %21 : vector<16x128xf32>
    %c0_10 = arith.constant 0 : index
    %c0_11 = arith.constant 0 : index
    %23 = vector.load %arg8[%c0_10, %c0_11] : memref<16x128xf32, #tpu.memory_space<vmem>>, vector<16x128xf32>
    %24 = arith.truncf %22 : vector<16x128xf32> to vector<16x128xbf16>
    %c0_12 = arith.constant 0 : index
    %c0_13 = arith.constant 0 : index
    %25 = vector.load %arg5[%c0_12, %c0_13] : memref<128x128xbf16, #tpu.memory_space<vmem>>, vector<128x128xbf16>
    %cst_14 = arith.constant dense<0.000000e+00> : vector<16x128xf32>
    %26 = tpu.matmul %24, %25, %cst_14 {dimension_numbers = #tpu.dot_dimension_numbers<[1], [0], [0], [1], [0, 0, 1, 1], [], []>} : vector<16x128xbf16>, vector<128x128xbf16>, vector<16x128xf32> -> vector<16x128xf32>
    %27 = arith.addf %23, %26 : vector<16x128xf32>
    %c0_15 = arith.constant 0 : index
    %c0_16 = arith.constant 0 : index
    %28 = vector.load %arg8[%c0_15, %c0_16] : memref<16x128xf32, #tpu.memory_space<vmem>>, vector<16x128xf32>
    tpu.vector_store %arg8[%c0_15, %c0_16], %27 {strides = array<i32>} : memref<16x128xf32, #tpu.memory_space<vmem>>, vector<16x128xf32>,
    %c1_i32 = arith.constant 1 : i32
    %29 = arith.cmpi eq, %arg1, %c1_i32 : i32
    %30 = arith.extui %29 : i1 to i32
    %c0_i32_17 = arith.constant 0 : i32
    %31 = arith.cmpi ne, %30, %c0_i32_17 : i32
    scf.if %31 {
      %c0_18 = arith.constant 0 : index
      %c0_19 = arith.constant 0 : index
      %32 = vector.load %arg8[%c0_18, %c0_19] : memref<16x128xf32, #tpu.memory_space<vmem>>, vector<16x128xf32>
      %c0_20 = arith.constant 0 : index
      %c0_21 = arith.constant 0 : index
      %33 = vector.load %arg7[%c0_20, %c0_21] : memref<16x128xf32, #tpu.memory_space<vmem>>, vector<16x128xf32>
      tpu.vector_store %arg7[%c0_20, %c0_21], %32 {strides = array<i32>} : memref<16x128xf32, #tpu.memory_space<vmem>>, vector<16x128xf32>,
    } else {
    }
    return
  }
  func.func @transform_0(%arg0: i32, %arg1: i32) -> (i32, i32) {
    %c0_i32 = arith.constant 0 : i32
    %c0_i32_0 = arith.constant 0 : i32
    return %arg0, %c0_i32 : i32, i32
  }
  func.func @transform_1(%arg0: i32, %arg1: i32) -> (i32, i32) {
    %c0_i32 = arith.constant 0 : i32
    %c0_i32_0 = arith.constant 0 : i32
    return %c0_i32, %arg1 : i32, i32
  }
  func.func @transform_2(%arg0: i32, %arg1: i32) -> (i32, i32) {
    %c0_i32 = arith.constant 0 : i32
    %c0_i32_0 = arith.constant 0 : i32
    return %c0_i32, %arg1 : i32, i32
  }
  func.func @transform_3(%arg0: i32, %arg1: i32) -> (i32, i32) {
    %c0_i32 = arith.constant 0 : i32
    %c0_i32_0 = arith.constant 0 : i32
    return %arg1, %c0_i32 : i32, i32
  }
  func.func @transform_4(%arg0: i32, %arg1: i32) -> (i32, i32) {
    %c0_i32 = arith.constant 0 : i32
    %c0_i32_0 = arith.constant 0 : i32
    %c0_i32_1 = arith.constant 0 : i32
    return %c0_i32, %c0_i32_0 : i32, i32
  }
  func.func @transform_5(%arg0: i32, %arg1: i32) -> (i32, i32) {
    %c0_i32 = arith.constant 0 : i32
    %c0_i32_0 = arith.constant 0 : i32
    return %arg0, %c0_i32 : i32, i32
  }
}

</mosaic_0001>

<llo_original>
// kernel: tpu_custom_call.1
$region0: #{tpu_custom_call.1}
  #allocation0 [shape = 'u32[]', space=smem, size = 0x4, offset = 0x4, fixed_abs, tag = 'smem constant byte address 0x4 - core index']
  #allocation1 [shape = 'u32[144,128]{1,0:T(1,128)}', space=vmem, size = 0x12000, scoped, tag = 'internal scratch']
  #allocation2 [shape = 'f32[16,128]{1,0:T(8,128)}', space=vmem, size = 0x2000, scoped, tag = 'scratch operand']
  %s0 = inlined_call_operand.hbm [shape: f32[16,128], index: 0, kind: input, shape index: {}]
  %s1 = inlined_call_operand.hbm [shape: bf16[128,256], index: 1, kind: input, shape index: {}]
  %s2 = inlined_call_operand.vmem [shape: f32[1,256], index: 2, kind: input, shape index: {}]
  %s3 = inlined_call_operand.hbm [shape: bf16[256,128], index: 3, kind: input, shape index: {}]
  %s4 = inlined_call_operand.vmem [shape: f32[1,128], index: 4, kind: input, shape index: {}]
  %s5 = inlined_call_operand.hbm [shape: f32[16,128], index: 5, kind: output, shape index: {}]
  %s6 = sld [smem:[#allocation0]]
  $region73: #{tpu_custom_call.1} parent=0
    _
  %s8 = ssub.s32 1, %s6
  %s9 = scalar_select 0, %s8, %s6
  $region1: #{tpu_custom_call.1} parent=0
    #allocation3 [shape = 'u8[8192]{0}', space=vmem, size = 0x2000, scoped, tag = 'input window, operand 0, single buffered']
    #allocation4 [shape = 's32[2]{0}', space=sflag, size = 0x8, scoped, tag = 'scoped memory for tpu_custom_call.1']
    #allocation5 [shape = 's32[2]{0}', space=sflag, size = 0x8, scoped, tag = 'scoped memory for tpu_custom_call.1']
    #allocation6 [shape = 'u8[65536]{0}', space=vmem, size = 0x10000, scoped, tag = 'input window, operand 1']
    #allocation7 [shape = 's32[2]{0}', space=sflag, size = 0x8, scoped, tag = 'scoped memory for tpu_custom_call.1']
    #allocation8 [shape = 'u8[65536]{0}', space=vmem, size = 0x10000, scoped, tag = 'input window, operand 3']
    #allocation9 [shape = 'u8[8192]{0}', space=vmem, size = 0x2000, scoped, tag = 'output window, operand 0, single buffered']
    %10 = vsyncpa [#allocation4], 0
    %11 = vsyncpa [#allocation7], 0
    %s12 = scalar_lea.sflag [#allocation7], 1
    %13 = vsyncpa %s12, 0
    %14 = vsyncpa [#allocation5], 0
    loop: start=0, step=1, limit=4
    $region2: #{tpu_custom_call.1} parent=1 // loop_pre_header
      _
    $region3: #{tpu_custom_call.1} parent=1 // loop_header
      %s16 = sphi 0, %s20
      %p17 = scmp.ge.s32.totalorder %s16, 4
      %s23 = sphi 0, %s35
      %s24 = sphi 0, %s31
      %s25 = sphi 0, %s23
      %s26 = sphi 0, %s24
      %s27 = sphi 0, %s25
      %s28 = sphi 0, %s26
      %s38 = sphi 0, %s40
      %s41 = sphi 0, %s38
      %s42 = sphi 0, %s41
      %s58 = sphi 0, %s42
      %s64 = sphi 0, %s66
      %s67 = sphi 0, %s64
      %s68 = sphi 0, %s67
      %s84 = sphi 0, %s68
      %s90 = sphi 0, %s92
      %s93 = sphi 0, %s90
      %s94 = sphi 0, %s93
      %s110 = sphi 0, %s94
      %s116 = sphi 0, %s118
      %s119 = sphi 0, %s116
      %s120 = sphi 0, %s119
      %s136 = sphi 0, %s120
      %s140 = sphi 0, %s140
      %s142 = sphi 0, %s140
      %s143 = sphi 0, %s142
      %s157 = sphi 0, %s143
      %s163 = sphi 0, %s165
      %s166 = sphi 0, %s163
      %s167 = sphi 0, %s166
      %s183 = sphi 0, %s167
    $region4: #{tpu_custom_call.1} parent=1 // loop_header_branch
      %19 = sbr.rel (%p17) target = $region8
    $region5: #{tpu_custom_call.1} parent=1 // loop_body
      %s21 = ssub.s32 %s16, 1
      %s22 = ssub.s32 %s16, 2
      %s29 = sadd.s32 1, %s24
      %p30 = scmp.ge.s32.totalorder %s29, 2
      %s31 = scalar_select %p30, 0, %s29
      %s32 = sadd.s32 1, %s23
      %s33 = scalar_select %p30, %s32, %s23
      %p34 = scmp.ge.s32.totalorder %s33, 1
      %s35 = scalar_select %p34, 0, %s33
      %s36 = ssub.s32 %s23, %s35
      %p37 = scmp.eq.s32.totalorder %s36, 0
      %s39 = sadd.s32 %s38, 1
      %s40 = scalar_select %p37, %s38, %s39
      %p43 = pneg %p37
      %p44 = scmp.eq.s32.totalorder %s16, 1
      %p45 = por %p43, %p44
      %p46 = scmp.ne.s32.totalorder %s38, %s41
      %p47 = scmp.eq.s32.totalorder %s16, 0
      %p48 = por %p46, %p47
      %p49 = scmp.ne.s32.totalorder %s38, %s41
      %p50 = scmp.eq.s32.totalorder %s21, 1
      %p51 = por %p49, %p50
      %p52 = scmp.ne.s32.totalorder %s41, %s42
      %p53 = scmp.eq.s32.totalorder %s21, 0
      %p54 = por %p52, %p53
      %p55 = scmp.ne.s32.totalorder %s41, %s42
      %p56 = scmp.eq.s32.totalorder %s22, 1
      %p57 = por %p55, %p56
      %p59 = scmp.ne.s32.totalorder %s42, %s58
      %p60 = scmp.eq.s32.totalorder %s22, 0
      %p61 = por %p59, %p60
      %s62 = ssub.s32 %s24, %s31
      %p63 = scmp.eq.s32.totalorder %s62, 0
      %s65 = sadd.s32 %s64, 1
      %s66 = scalar_select %p63, %s64, %s65
      %p69 = pneg %p63
      %p70 = scmp.eq.s32.totalorder %s16, 1
      %p71 = por %p69, %p70
      %p72 = scmp.ne.s32.totalorder %s64, %s67
      %p73 = scmp.eq.s32.totalorder %s16, 0
      %p74 = por %p72, %p73
      %p75 = scmp.ne.s32.totalorder %s64, %s67
      %p76 = scmp.eq.s32.totalorder %s21, 1
      %p77 = por %p75, %p76
      %p78 = scmp.ne.s32.totalorder %s67, %s68
      %p79 = scmp.eq.s32.totalorder %s21, 0
      %p80 = por %p78, %p79
      %p81 = scmp.ne.s32.totalorder %s67, %s68
      %p82 = scmp.eq.s32.totalorder %s22, 1
      %p83 = por %p81, %p82
      %p85 = scmp.ne.s32.totalorder %s68, %s84
      %p86 = scmp.eq.s32.totalorder %s22, 0
      %p87 = por %p85, %p86
      %s88 = ssub.s32 %s24, %s31
      %p89 = scmp.eq.s32.totalorder %s88, 0
      %s91 = sadd.s32 %s90, 1
      %s92 = scalar_select %p89, %s90, %s91
      %p95 = pneg %p89
      %p96 = scmp.eq.s32.totalorder %s16, 1
      %p97 = por %p95, %p96
      %p98 = scmp.ne.s32.totalorder %s90, %s93
      %p99 = scmp.eq.s32.totalorder %s16, 0
      %p100 = por %p98, %p99
      %p101 = scmp.ne.s32.totalorder %s90, %s93
      %p102 = scmp.eq.s32.totalorder %s21, 1
      %p103 = por %p101, %p102
      %p104 = scmp.ne.s32.totalorder %s93, %s94
      %p105 = scmp.eq.s32.totalorder %s21, 0
      %p106 = por %p104, %p105
      %p107 = scmp.ne.s32.totalorder %s93, %s94
      %p108 = scmp.eq.s32.totalorder %s22, 1
      %p109 = por %p107, %p108
      %p111 = scmp.ne.s32.totalorder %s94, %s110
      %p112 = scmp.eq.s32.totalorder %s22, 0
      %p113 = por %p111, %p112
      %s114 = ssub.s32 %s24, %s31
      %p115 = scmp.eq.s32.totalorder %s114, 0
      %s117 = sadd.s32 %s116, 1
      %s118 = scalar_select %p115, %s116, %s117
      %p121 = pneg %p115
      %p122 = scmp.eq.s32.totalorder %s16, 1
      %p123 = por %p121, %p122
      %p124 = scmp.ne.s32.totalorder %s116, %s119
      %p125 = scmp.eq.s32.totalorder %s16, 0
      %p126 = por %p124, %p125
      %p127 = scmp.ne.s32.totalorder %s116, %s119
      %p128 = scmp.eq.s32.totalorder %s21, 1
      %p129 = por %p127, %p128
      %p130 = scmp.ne.s32.totalorder %s119, %s120
      %p131 = scmp.eq.s32.totalorder %s21, 0
      %p132 = por %p130, %p131
      %p133 = scmp.ne.s32.totalorder %s119, %s120
      %p134 = scmp.eq.s32.totalorder %s22, 1
      %p135 = por %p133, %p134
      %p137 = scmp.ne.s32.totalorder %s120, %s136
      %p138 = scmp.eq.s32.totalorder %s22, 0
      %p139 = por %p137, %p138
      %s141 = sadd.s32 %s140, 1
      %p144 = scmp.eq.s32.totalorder %s16, 1
      %p145 = scmp.ne.s32.totalorder %s140, %s142
      %p146 = scmp.eq.s32.totalorder %s16, 0
      %p147 = por %p145, %p146
      %p148 = scmp.ne.s32.totalorder %s140, %s142
      %p149 = scmp.eq.s32.totalorder %s21, 1
      %p150 = por %p148, %p149
      %p151 = scmp.ne.s32.totalorder %s142, %s143
      %p152 = scmp.eq.s32.totalorder %s21, 0
      %p153 = por %p151, %p152
      %p154 = scmp.ne.s32.totalorder %s142, %s143
      %p155 = scmp.eq.s32.totalorder %s22, 1
      %p156 = por %p154, %p155
      %p158 = scmp.ne.s32.totalorder %s143, %s157
      %p159 = scmp.eq.s32.totalorder %s22, 0
      %p160 = por %p158, %p159
      %s161 = ssub.s32 %s23, %s35
      %p162 = scmp.eq.s32.totalorder %s161, 0
      %s164 = sadd.s32 %s163, 1
      %s165 = scalar_select %p162, %s163, %s164
      %p168 = pneg %p162
      %p169 = scmp.eq.s32.totalorder %s16, 1
      %p170 = por %p168, %p169
      %p171 = scmp.ne.s32.totalorder %s163, %s166
      %p172 = scmp.eq.s32.totalorder %s16, 0
      %p173 = por %p171, %p172
      %p174 = scmp.ne.s32.totalorder %s163, %s166
      %p175 = scmp.eq.s32.totalorder %s21, 1
      %p176 = por %p174, %p175
      %p177 = scmp.ne.s32.totalorder %s166, %s167
      %p178 = scmp.eq.s32.totalorder %s21, 0
      %p179 = por %p177, %p178
      %p180 = scmp.ne.s32.totalorder %s166, %s167
      %p181 = scmp.eq.s32.totalorder %s22, 1
      %p182 = por %p180, %p181
      %p184 = scmp.ne.s32.totalorder %s167, %s183
      %p185 = scmp.eq.s32.totalorder %s22, 0
      %p186 = por %p184, %p185
      %p187 = scmp.le.s32.totalorder 1, %s16
      %p188 = scmp.lt.s32.totalorder %s16, 3
      %p189 = pnand %p187, %p188
      %p190 = pneg %p189
      // Predicated region
      $region9: #{tpu_custom_call.1} parent=5 // pred_check
        _
      $region10: #{tpu_custom_call.1} parent=5 // pred_check_branch
        %192 = sbr.rel (%p189) target = $region12
      $region11: #{tpu_custom_call.1} parent=5 // pred_region
        %s193 = ssub.s32 %s16, 1
        // Predicated region
        $region13: #{tpu_custom_call.1} parent=11 // pred_check
          %p194 = pneg %p54
        $region14: #{tpu_custom_call.1} parent=11 // pred_check_branch
          %196 = sbr.rel (%p194) target = $region16
        $region15: #{tpu_custom_call.1} parent=11 // pred_region
          %s197 = smul.u32 2, %s25
          %s199 = ssub.s32 256, 256
          %200 = vsyncadd [#allocation4], %s199
          %s201 = smul.addr %s197, 128
          %s202 = scalar_lea.hbm %s0, %s201
          %s203 = sshll.u32 [#allocation3], 4
          %s204 = int_to_ptr.vmem [resolvable:$true] %s203
          %209 = dma.hbm_to_vmem [thread:$0]  %s202, 256, %s204, [#allocation4], 128, 128, 8
        $region16: #{tpu_custom_call.1} parent=11 // pred_fallthru
          _
        // Predicated region
        $region17: #{tpu_custom_call.1} parent=11 // pred_check
          %p210 = pneg %p153
        $region18: #{tpu_custom_call.1} parent=11 // pred_check_branch
          %212 = sbr.rel (%p210) target = $region20
        $region19: #{tpu_custom_call.1} parent=11 // pred_region
          _
        $region20: #{tpu_custom_call.1} parent=11 // pred_fallthru
          _
      $region12: #{tpu_custom_call.1} parent=5 // pred_fallthru
        _
      %p213 = scmp.lt.s32.totalorder %s16, 2
      // Predicated region
      $region21: #{tpu_custom_call.1} parent=5 // pred_check
        %p214 = pneg %p213
      $region22: #{tpu_custom_call.1} parent=5 // pred_check_branch
        %216 = sbr.rel (%p214) target = $region24
      $region23: #{tpu_custom_call.1} parent=5 // pred_region
        // Predicated region
        $region25: #{tpu_custom_call.1} parent=23 // pred_check
          %p217 = pneg %p74
        $region26: #{tpu_custom_call.1} parent=23 // pred_check_branch
          %219 = sbr.rel (%p217) target = $region28
        $region27: #{tpu_custom_call.1} parent=23 // pred_region
          %s220 = sand.u32 %s16, 1
          %s221 = scalar_lea.sflag [#allocation7], %s220
          %s222 = sand.u32 %s64, 1
          %s223 = smul.addr %s222, 64
          %s224 = scalar_lea.vmem [#allocation6], %s223
          %s226 = ssub.s32 1024, 1024
          %227 = vsyncadd %s221, %s226
          %s228 = smul.addr %s24, 64
          %s229 = scalar_lea.hbm %s1, %s228
          %s230 = sshll.u32 %s224, 4
          %s231 = int_to_ptr.vmem [resolvable:$true] %s230
          %236 = dma.hbm_to_vmem [thread:$0]  %s229, 1024, %s231, %s221, 128, 64, 4
        $region28: #{tpu_custom_call.1} parent=23 // pred_fallthru
          _
        // Predicated region
        $region29: #{tpu_custom_call.1} parent=23 // pred_check
          %p237 = pneg %p100
        $region30: #{tpu_custom_call.1} parent=23 // pred_check_branch
          %239 = sbr.rel (%p237) target = $region32
        $region31: #{tpu_custom_call.1} parent=23 // pred_region
          %p240 = scmp.lt.s32.totalorder %s24, 1
          %s241 = scalar_select %p240, %s24, 1
          %s242 = scalar_lea.vmem %s2, %s241
        $region32: #{tpu_custom_call.1} parent=23 // pred_fallthru
          _
        // Predicated region
        $region33: #{tpu_custom_call.1} parent=23 // pred_check
          %p243 = pneg %p126
        $region34: #{tpu_custom_call.1} parent=23 // pred_check_branch
          %245 = sbr.rel (%p243) target = $region36
        $region35: #{tpu_custom_call.1} parent=23 // pred_region
          %s246 = sand.u32 %s16, 1
          %s247 = scalar_lea.sflag [#allocation7], %s246
          %s248 = sand.u32 %s116, 1
          %s249 = smul.addr %s248, 64
          %s250 = scalar_lea.vmem [#allocation8], %s249
          %s251 = smul.u32 16, %s24
          %s253 = ssub.s32 1024, 1024
          %254 = vsyncadd %s247, %s253
          %s255 = smul.addr %s251, 64
          %s256 = scalar_lea.hbm %s3, %s255
          %s257 = sshll.u32 %s250, 4
          %s258 = int_to_ptr.vmem [resolvable:$true] %s257
          %263 = dma.hbm_to_vmem [thread:$0]  %s256, 1024, %s258, %s247, 64, 64, 4
        $region36: #{tpu_custom_call.1} parent=23 // pred_fallthru
          _
      $region24: #{tpu_custom_call.1} parent=5 // pred_fallthru
        _
      %p264 = scmp.le.s32.totalorder 1, %s16
      %p265 = scmp.lt.s32.totalorder %s16, 3
      %p266 = pnand %p264, %p265
      %p267 = pneg %p266
      // Predicated region
      $region37: #{tpu_custom_call.1} parent=5 // pred_check
        _
      $region38: #{tpu_custom_call.1} parent=5 // pred_check_branch
        %269 = sbr.rel (%p266) target = $region40
      $region39: #{tpu_custom_call.1} parent=5 // pred_region
        %s270 = ssub.s32 %s16, 1
        // Predicated region
        $region41: #{tpu_custom_call.1} parent=39 // pred_check
          %p271 = pneg %p54
        $region42: #{tpu_custom_call.1} parent=39 // pred_check_branch
          %273 = sbr.rel (%p271) target = $region44
        $region43: #{tpu_custom_call.1} parent=39 // pred_region
          %274 = dma.done [#allocation4], 256
        $region44: #{tpu_custom_call.1} parent=39 // pred_fallthru
          _
        %s275 = sand.u32 %s21, 1
        %s276 = scalar_lea.sflag [#allocation7], %s275
        %s277 = sand.u32 %s67, 1
        %s278 = smul.addr %s277, 64
        %s279 = scalar_lea.vmem [#allocation6], %s278
        // Predicated region
        $region45: #{tpu_custom_call.1} parent=39 // pred_check
          %p280 = pneg %p80
        $region46: #{tpu_custom_call.1} parent=39 // pred_check_branch
          %282 = sbr.rel (%p280) target = $region48
        $region47: #{tpu_custom_call.1} parent=39 // pred_region
          %283 = dma.done %s276, 1024
        $region48: #{tpu_custom_call.1} parent=39 // pred_fallthru
          _
        %s284 = sand.u32 %s21, 1
        %s285 = scalar_lea.sflag [#allocation7], %s284
        %s286 = sand.u32 %s119, 1
        %s287 = smul.addr %s286, 64
        %s288 = scalar_lea.vmem [#allocation8], %s287
        // Predicated region
        $region49: #{tpu_custom_call.1} parent=39 // pred_check
          %p289 = pneg %p132
        $region50: #{tpu_custom_call.1} parent=39 // pred_check_branch
          %291 = sbr.rel (%p289) target = $region52
        $region51: #{tpu_custom_call.1} parent=39 // pred_region
          %292 = dma.done %s285, 1024
        $region52: #{tpu_custom_call.1} parent=39 // pred_fallthru
          _
        %p293 = pneg %p54
        %p294 = pneg %p51
        %s295 = sand.u32 %s21, 1
        %s296 = scalar_lea.sflag [#allocation7], %s295
        %s297 = sand.u32 %s67, 1
        %s298 = smul.addr %s297, 64
        %s299 = scalar_lea.vmem [#allocation6], %s298
        %p300 = pneg %p80
        %p301 = pneg %p77
        %p302 = scmp.lt.s32.totalorder %s26, 1
        %s303 = scalar_select %p302, %s26, 1
        %s304 = scalar_lea.vmem %s2, %s303
        %p305 = pneg %p106
        %p306 = pneg %p103
        %s307 = sand.u32 %s21, 1
        %s308 = scalar_lea.sflag [#allocation7], %s307
        %s309 = sand.u32 %s119, 1
        %s310 = smul.addr %s309, 64
        %s311 = scalar_lea.vmem [#allocation8], %s310
        %p312 = pneg %p132
        %p313 = pneg %p129
        %p314 = pneg %p153
        %p315 = pneg %p150
        %p316 = pneg %p179
        %p317 = pneg %p176
        %s318 = smul.u32 2, %s25
        %p319 = scmp.lt.s32.totalorder %s26, 1
        %s320 = scalar_select %p319, %s26, 1
        %s321 = scalar_lea.vmem %s2, %s320
        %s322 = smul.u32 16, %s26
        %s323 = smul.u32 2, %s25
        %p325 = scmp.eq.s32.totalorder %s26, 0
        // Predicated region
        $region53: #{tpu_custom_call.1} parent=39 // pred_check
          %p326 = pneg %p325
        $region54: #{tpu_custom_call.1} parent=39 // pred_check_branch
          %328 = sbr.rel (%p326) target = $region56
        $region55: #{tpu_custom_call.1} parent=39 // pred_region
          %v329 = vld [vmem:[%s4] sm:$0x1]
          %v331 = vlaneseq
          %v332 = vshrl.u32 %v331, 7
          %v333 = vsub.s32 0, %v332
          %v334 = vrot.slane %v329, %v333
          %336 = vst [vmem:[#allocation2] sm:$0xff] %v334
          %337 = vst [vmem:[#allocation2 + $0x8] sm:$0xff] %v334
        $region56: #{tpu_custom_call.1} parent=39 // pred_fallthru
          _
        %v338 = vld [vmem:[#allocation3] sm:$0xff]
        %v339 = vld [vmem:[#allocation3 + $0x8] sm:$0xff]
        %v340 = vpack.c.bf16 %v339, %v338
        %v341 = vld [vmem:[%s279] sm:$0xf]
        %v342 = vld [vmem:[%s279 + $0x4] sm:$0xf]
        %v343 = vld [vmem:[%s279 + $0x8] sm:$0xf]
        %v344 = vld [vmem:[%s279 + $0xc] sm:$0xf]
        %v345 = vld [vmem:[%s279 + $0x10] sm:$0xf]
        %v346 = vld [vmem:[%s279 + $0x14] sm:$0xf]
        %v347 = vld [vmem:[%s279 + $0x18] sm:$0xf]
        %v348 = vld [vmem:[%s279 + $0x1c] sm:$0xf]
        %v349 = vld [vmem:[%s279 + $0x20] sm:$0xf]
        %v350 = vld [vmem:[%s279 + $0x24] sm:$0xf]
        %v351 = vld [vmem:[%s279 + $0x28] sm:$0xf]
        %v352 = vld [vmem:[%s279 + $0x2c] sm:$0xf]
        %v353 = vld [vmem:[%s279 + $0x30] sm:$0xf]
        %v354 = vld [vmem:[%s279 + $0x34] sm:$0xf]
        %v355 = vld [vmem:[%s279 + $0x38] sm:$0xf]
        %v356 = vld [vmem:[%s279 + $0x3c] sm:$0xf]
        %v357 = vld [vmem:[%s321] sm:$0x1]
        %v359 = vlaneseq
        %v360 = vshrl.u32 %v359, 7
        %v361 = vsub.s32 0, %v360
        %v362 = vrot.slane %v357, %v361
        %v380 = vunpack.c.l.b16 %v341
        %v381 = vunpack.c.l.b16 %v342
        %v382 = vunpack.c.l.b16 %v343
        %v383 = vunpack.c.l.b16 %v344
        %v384 = vunpack.c.l.b16 %v345
        %v385 = vunpack.c.l.b16 %v346
        %v386 = vunpack.c.l.b16 %v347
        %v387 = vunpack.c.l.b16 %v348
        %v388 = vunpack.c.l.b16 %v349
        %v389 = vunpack.c.l.b16 %v350
        %v390 = vunpack.c.l.b16 %v351
        %v391 = vunpack.c.l.b16 %v352
        %v392 = vunpack.c.l.b16 %v353
        %v393 = vunpack.c.l.b16 %v354
        %v394 = vunpack.c.l.b16 %v355
        %v395 = vunpack.c.l.b16 %v356
        %v396 = vpack.c.b16 %v381, %v380
        %v397 = vpack.c.b16 %v383, %v382
        %v398 = vpack.c.b16 %v385, %v384
        %v399 = vpack.c.b16 %v387, %v386
        %v400 = vpack.c.b16 %v389, %v388
        %v401 = vpack.c.b16 %v391, %v390
        %v402 = vpack.c.b16 %v393, %v392
        %v403 = vpack.c.b16 %v395, %v394
        %412 = vmatprep.subr.bf16.mxu0 0
        %413 = vmatpush1.bf16.msra.mxu0 %v396
        %414 = vmatprep.subr.bf16.mxu0 0
        %415 = vmatpush1.bf16.msra.mxu0 %v397
        %416 = vmatprep.subr.bf16.mxu0 0
        %417 = vmatpush1.bf16.msra.mxu0 %v398
        %418 = vmatprep.subr.bf16.mxu0 0
        %419 = vmatpush1.bf16.msra.mxu0 %v399
        %420 = vmatprep.subr.bf16.mxu0 0
        %421 = vmatpush1.bf16.msra.mxu0 %v400
        %422 = vmatprep.subr.bf16.mxu0 0
        %423 = vmatpush1.bf16.msra.mxu0 %v401
        %424 = vmatprep.subr.bf16.mxu0 0
        %425 = vmatpush1.bf16.msra.mxu0 %v402
        %426 = vmatprep.subr.bf16.mxu0 0
        %427 = vmatpush1.bf16.msra.mxu0 %v403
        %428 = vmatprep.subr.bf16.mxu0 0
        %429 = vmatpush1.bf16.msra.mxu0 0
        %430 = vmatprep.subr.bf16.mxu0 0
        %431 = vmatpush1.bf16.msra.mxu0 0
        %432 = vmatprep.subr.bf16.mxu0 0
        %433 = vmatpush1.bf16.msra.mxu0 0
        %434 = vmatprep.subr.bf16.mxu0 0
        %435 = vmatpush1.bf16.msra.mxu0 0
        %436 = vmatprep.subr.bf16.mxu0 0
        %437 = vmatpush1.bf16.msra.mxu0 0
        %438 = vmatprep.subr.bf16.mxu0 0
        %439 = vmatpush1.bf16.msra.mxu0 0
        %440 = vmatprep.subr.bf16.mxu0 0
        %441 = vmatpush1.bf16.msra.mxu0 0
        %442 = vmatprep.subr.bf16.mxu0 0
        %443 = vmatpush1.bf16.msra.mxu0 0
        %444 = vmatprep.mubr.bf16.mxu0 0
        %445 = vmatmul.mubr.bf16.gmra.mrb[0].mxu0 %v340
        %v446 = vpop.f32.mrb[0].mxu0
        %v447 = vadd.f32 %v362, %v446
        %v448 = vpop.f32.mrb[0].mxu0
        %v449 = vpop.f32.mrb[0].mxu0
        %v450 = vadd.f32 %v362, %v449
        %v451 = vpop.f32.mrb[0].mxu0
        %452 = vdwg.mxu0
        %v453 = vmul.f32 %v447, 0.5
        %v454 = vmul.f32 %v450, 0.5
        %v455 = vmul.f32 %v447, 0.044715
        %v456 = vmul.f32 %v450, 0.044715
        %v457 = vmul.f32 %v455, %v447
        %v458 = vmul.f32 %v456, %v450
        %v459 = vmul.f32 %v457, %v447
        %v460 = vmul.f32 %v458, %v450
        %v461 = vadd.f32 %v447, %v459
        %v462 = vadd.f32 %v450, %v460
        %v463 = vmul.f32 %v461, 0.7978846
        %v464 = vmul.f32 %v462, 0.7978846
        %v465 = vtanh.pop %v463
        %v466 = vtanh.pop %v464
        %v467 = vadd.f32 %v465, 1.0
        %v468 = vadd.f32 %v466, 1.0
        %v469 = vmul.f32 %v453, %v467
        %v470 = vmul.f32 %v454, %v468
        %v471 = vld [vmem:[#allocation2] sm:$0xff]
        %v472 = vld [vmem:[#allocation2 + $0x8] sm:$0xff]
        %v473 = vpack.c.bf16 %v470, %v469
        %v474 = vld [vmem:[%s288] sm:$0xf]
        %v475 = vld [vmem:[%s288 + $0x4] sm:$0xf]
        %v476 = vld [vmem:[%s288 + $0x8] sm:$0xf]
        %v477 = vld [vmem:[%s288 + $0xc] sm:$0xf]
        %v478 = vld [vmem:[%s288 + $0x10] sm:$0xf]
        %v479 = vld [vmem:[%s288 + $0x14] sm:$0xf]
        %v480 = vld [vmem:[%s288 + $0x18] sm:$0xf]
        %v481 = vld [vmem:[%s288 + $0x1c] sm:$0xf]
        %v482 = vld [vmem:[%s288 + $0x20] sm:$0xf]
        %v483 = vld [vmem:[%s288 + $0x24] sm:$0xf]
        %v484 = vld [vmem:[%s288 + $0x28] sm:$0xf]
        %v485 = vld [vmem:[%s288 + $0x2c] sm:$0xf]
        %v486 = vld [vmem:[%s288 + $0x30] sm:$0xf]
        %v487 = vld [vmem:[%s288 + $0x34] sm:$0xf]
        %v488 = vld [vmem:[%s288 + $0x38] sm:$0xf]
        %v489 = vld [vmem:[%s288 + $0x3c] sm:$0xf]
        %v506 = vunpack.c.l.b16 %v474
        %v507 = vunpack.c.l.b16 %v475
        %v508 = vunpack.c.l.b16 %v476
        %v509 = vunpack.c.l.b16 %v477
        %v510 = vunpack.c.l.b16 %v478
        %v511 = vunpack.c.l.b16 %v479
        %v512 = vunpack.c.l.b16 %v480
        %v513 = vunpack.c.l.b16 %v481
        %v514 = vunpack.c.l.b16 %v482
        %v515 = vunpack.c.l.b16 %v483
        %v516 = vunpack.c.l.b16 %v484
        %v517 = vunpack.c.l.b16 %v485
        %v518 = vunpack.c.l.b16 %v486
        %v519 = vunpack.c.l.b16 %v487
        %v520 = vunpack.c.l.b16 %v488
        %v521 = vunpack.c.l.b16 %v489
        %v522 = vpack.c.b16 %v507, %v506
        %v523 = vpack.c.b16 %v509, %v508
        %v524 = vpack.c.b16 %v511, %v510
        %v525 = vpack.c.b16 %v513, %v512
        %v526 = vpack.c.b16 %v515, %v514
        %v527 = vpack.c.b16 %v517, %v516
        %v528 = vpack.c.b16 %v519, %v518
        %v529 = vpack.c.b16 %v521, %v520
        %538 = vmatprep.subr.bf16.mxu0 0
        %539 = vmatpush1.bf16.msra.mxu0 %v522
        %540 = vmatprep.subr.bf16.mxu0 0
        %541 = vmatpush1.bf16.msra.mxu0 %v523
        %542 = vmatprep.subr.bf16.mxu0 0
        %543 = vmatpush1.bf16.msra.mxu0 %v524
        %544 = vmatprep.subr.bf16.mxu0 0
        %545 = vmatpush1.bf16.msra.mxu0 %v525
        %546 = vmatprep.subr.bf16.mxu0 0
        %547 = vmatpush1.bf16.msra.mxu0 %v526
        %548 = vmatprep.subr.bf16.mxu0 0
        %549 = vmatpush1.bf16.msra.mxu0 %v527
        %550 = vmatprep.subr.bf16.mxu0 0
        %551 = vmatpush1.bf16.msra.mxu0 %v528
        %552 = vmatprep.subr.bf16.mxu0 0
        %553 = vmatpush1.bf16.msra.mxu0 %v529
        %554 = vmatprep.subr.bf16.mxu0 0
        %555 = vmatpush1.bf16.msra.mxu0 0
        %556 = vmatprep.subr.bf16.mxu0 0
        %557 = vmatpush1.bf16.msra.mxu0 0
        %558 = vmatprep.subr.bf16.mxu0 0
        %559 = vmatpush1.bf16.msra.mxu0 0
        %560 = vmatprep.subr.bf16.mxu0 0
        %561 = vmatpush1.bf16.msra.mxu0 0
        %562 = vmatprep.subr.bf16.mxu0 0
        %563 = vmatpush1.bf16.msra.mxu0 0
        %564 = vmatprep.subr.bf16.mxu0 0
        %565 = vmatpush1.bf16.msra.mxu0 0
        %566 = vmatprep.subr.bf16.mxu0 0
        %567 = vmatpush1.bf16.msra.mxu0 0
        %568 = vmatprep.subr.bf16.mxu0 0
        %569 = vmatpush1.bf16.msra.mxu0 0
        %570 = vmatprep.mubr.bf16.mxu0 0
        %571 = vmatmul.mubr.bf16.gmra.mrb[0].mxu0 %v473
        %v572 = vpop.f32.mrb[0].mxu0
        %v573 = vadd.f32 0.0, %v572
        %v574 = vpop.f32.mrb[0].mxu0
        %v575 = vpop.f32.mrb[0].mxu0
        %v576 = vadd.f32 0.0, %v575
        %v577 = vpop.f32.mrb[0].mxu0
        %578 = vdwg.mxu0
        %v579 = vadd.f32 %v471, %v573
        %v580 = vadd.f32 %v472, %v576
        %581 = vst [vmem:[#allocation2] sm:$0xff] %v579
        %582 = vst [vmem:[#allocation2 + $0x8] sm:$0xff] %v580
        %p583 = scmp.eq.s32.totalorder %s26, 1
        // Predicated region
        $region57: #{tpu_custom_call.1} parent=39 // pred_check
          %p584 = pneg %p583
        $region58: #{tpu_custom_call.1} parent=39 // pred_check_branch
          %586 = sbr.rel (%p584) target = $region60
        $region59: #{tpu_custom_call.1} parent=39 // pred_region
          %v587 = vld [vmem:[#allocation2] sm:$0xff]
          %v588 = vld [vmem:[#allocation2 + $0x8] sm:$0xff]
          %589 = vst [vmem:[#allocation9] sm:$0xff] %v587
          %590 = vst [vmem:[#allocation9 + $0x8] sm:$0xff] %v588
        $region60: #{tpu_custom_call.1} parent=39 // pred_fallthru
          _
        // Predicated region
        $region61: #{tpu_custom_call.1} parent=39 // pred_check
          %p591 = pneg %p176
        $region62: #{tpu_custom_call.1} parent=39 // pred_check_branch
          %593 = sbr.rel (%p591) target = $region64
        $region63: #{tpu_custom_call.1} parent=39 // pred_region
          %s594 = smul.u32 2, %s25
          %s596 = ssub.s32 256, 256
          %597 = vsyncadd [#allocation5], %s596
          %s598 = smul.addr %s594, 128
          %s599 = scalar_lea.hbm %s5, %s598
          %s600 = sshll.u32 [#allocation9], 4
          %s601 = int_to_ptr.vmem [resolvable:$true] %s600
          %606 = dma.vmem_to_hbm [thread:$0]  %s601, 256, %s599, [#allocation5], 128, 128, 8
        $region64: #{tpu_custom_call.1} parent=39 // pred_fallthru
          _
        // Predicated region
        $region65: #{tpu_custom_call.1} parent=39 // pred_check
          %p607 = pneg %p176
        $region66: #{tpu_custom_call.1} parent=39 // pred_check_branch
          %609 = sbr.rel (%p607) target = $region68
        $region67: #{tpu_custom_call.1} parent=39 // pred_region
          %610 = dma.done [#allocation5], 256
        $region68: #{tpu_custom_call.1} parent=39 // pred_fallthru
          _
      $region40: #{tpu_custom_call.1} parent=5 // pred_fallthru
        _
      %p611 = scmp.le.s32.totalorder 2, %s16
      // Predicated region
      $region69: #{tpu_custom_call.1} parent=5 // pred_check
        %p612 = pneg %p611
      $region70: #{tpu_custom_call.1} parent=5 // pred_check_branch
        %614 = sbr.rel (%p612) target = $region72
      $region71: #{tpu_custom_call.1} parent=5 // pred_region
        %s615 = ssub.s32 %s16, 2
      $region72: #{tpu_custom_call.1} parent=5 // pred_fallthru
        _
    $region6: #{tpu_custom_call.1} parent=1 // loop_footer
      %s20 = sadd.s32 1, %s16
    $region7: #{tpu_custom_call.1} parent=1 // loop_footer_branch
      %15 = sbr.rel target = $region3
    $region8: #{tpu_custom_call.1} parent=1 // loop_exit
      _
    %616 = vsyncpa [#allocation4], 1
    %s617 = scalar_lea.sflag [#allocation4], 1
    %618 = vsyncpa %s617, 1
    %619 = vsyncpa [#allocation7], 1
    %s620 = scalar_lea.sflag [#allocation7], 1
    %621 = vsyncpa %s620, 1
    %622 = vsyncpa [#allocation5], 1
    %s623 = scalar_lea.sflag [#allocation5], 1
    %624 = vsyncpa %s623, 1

</llo_original>
